<compile_context>
chip_gen: v7x
topology: tpu7x:2x2x1
jax: 0.10.0
libtpu: 0.0.40
codegen_flags: <defaults>
</compile_context>

<pallas_src>
import jax
import jax.numpy as jnp
from jax.experimental import pallas as pl
from jax.experimental.pallas import tpu as pltpu


def _avg_pool_2x2_kernel(x_ref, o_ref):
    # x_ref block: (4, TR, TL) -- the four taps of each 2x2 window, each a
    # lane-dense (TR, TL) slab.  Pairwise (tree) sum, scale by 0.25, cast back.
    a = x_ref[0].astype(jnp.float32)
    b = x_ref[1].astype(jnp.float32)
    c = x_ref[2].astype(jnp.float32)
    d = x_ref[3].astype(jnp.float32)
    o_ref[...] = (((a + b) + (c + d)) * 0.25).astype(o_ref.dtype)


def _avg_pool_2x2(x, *, target_block_bytes=2 << 20):
    """2x2 / stride-2 average pooling over NCHW (== F.avg_pool2d(x, 2, 2))."""
    N, C, H, W = x.shape
    assert H % 2 == 0 and W % 2 == 0, "avg_pool2d(k=2, s=2) expects even H, W"
    Hh, Wh = H // 2, W // 2
    M = N * C
    L = Hh * Wh
    itemsize = jnp.dtype(x.dtype).itemsize

    # Layout plumbing (XLA, outside the kernel): window taps -> leading axis,
    # output spatial positions flattened onto the wide lane axis.
    #   xt[a*2+b, n*C+c, i*Wh+j] == x[n, c, 2*i+a, 2*j+b]
    xt = jnp.transpose(x.reshape(M, Hh, 2, Wh, 2), (2, 4, 0, 1, 3)).reshape(4, M, L)

    # Lane tile: a multiple of 128 that divides L when possible, else full L.
    if L % 128 == 0:
        tl = min(L, 1024)
        while L % tl != 0:
            tl //= 2
    else:
        tl = L

    # Row tile: target ~target_block_bytes of input per grid step, multiple of
    # 8 (sublane rule), clamped so the (possibly ragged) grid covers M.
    if M < 8:
        tr = M
    else:
        tr = max(8, (target_block_bytes // (4 * tl * itemsize)) // 8 * 8)
        tr = min(tr, (M // 8) * 8)
        # Keep at least 2 grid steps when the problem allows it so both v7x
        # TensorCores (megacore) get work.
        if pl.cdiv(M, tr) * (L // tl) < 2 and M >= 16:
            tr = max(8, ((pl.cdiv(M, 2) + 7) // 8) * 8)

    grid = (pl.cdiv(M, tr), L // tl)

    out = pl.pallas_call(
        _avg_pool_2x2_kernel,
        out_shape=jax.ShapeDtypeStruct((M, L), x.dtype),
        grid_spec=pltpu.PrefetchScalarGridSpec(
            num_scalar_prefetch=0,
            grid=grid,
            in_specs=[pl.BlockSpec((4, tr, tl), lambda i, j: (0, i, j))],
            out_specs=pl.BlockSpec((tr, tl), lambda i, j: (i, j)),
        ),
        compiler_params=pltpu.CompilerParams(
            dimension_semantics=("parallel", "parallel")),
    )(xt)

    return out.reshape(N, C, Hh, Wh)


def g_downsample(x, channels, use_conv=False, g_equiv=False, g_input="C4",
                 dims=2, out_channels=None):
    """Forward pass of GDownsample (default configuration: avg-pool path)."""
    out_channels = out_channels or channels
    assert isinstance(g_input, str)
    assert x.shape[1] == channels, f" {x.shape[1]} || {channels}"
    if use_conv or dims != 2:
        # TODO(synk): use_conv=True (strided 3x3 (group-equivariant) conv via
        # gconv_nd / SplitGConv2d) and dims != 2 paths are not translated.
        raise NotImplementedError("only use_conv=False, dims=2 is implemented")
    assert channels == out_channels
    return _avg_pool_2x2(x)


if __name__ == "__main__":
    key = jax.random.PRNGKey(0)
    N, C, H, W = 2, 4, 16, 16
    x = jax.random.normal(key, (N, C, H, W), dtype=jnp.float32)

    y = g_downsample(x, channels=C, use_conv=False, g_equiv=False, g_input="C4")
    y = jax.block_until_ready(y)

    ref = x.reshape(N, C, H // 2, 2, W // 2, 2).mean(axis=(3, 5))
    assert y.shape == (N, C, H // 2, W // 2)
    assert jnp.allclose(y, ref, atol=1e-6, rtol=1e-5)

    # Ragged-row case (N*C not a multiple of the row tile): exercises the
    # pl.cdiv grid with OOB writes of the last block dropped.
    x2 = jax.random.normal(jax.random.PRNGKey(1), (3, 5, 16, 16), jnp.float32)
    y2 = jax.block_until_ready(g_downsample(x2, channels=5, g_input="C4"))
    ref2 = x2.reshape(3, 5, 8, 2, 8, 2).mean(axis=(3, 5))
    assert y2.shape == (3, 5, 8, 8)
    assert jnp.allclose(y2, ref2, atol=1e-6, rtol=1e-5)

    print("KERNEL_OK")
</pallas_src>

<mosaic_0001>
module attributes {stable_mosaic.version = 11 : i64} {
  func.func @_avg_pool_2x2_kernel(%arg0: i32, %arg1: i32, %arg2: memref<4x8x64xf32, #tpu.memory_space<vmem>>, %arg3: memref<8x64xf32, #tpu.memory_space<vmem>>) attributes {dimension_semantics = [#tpu.dimension_semantics<parallel>, #tpu.dimension_semantics<parallel>], iteration_bounds = array<i64: 1, 1>, scalar_prefetch = 0 : i64, scratch_operands = 0 : i64, tpu.core_type = #tpu.core_type<tc>, window_params = [{transform_indices = @transform_0, window_bounds = array<i64: 4, 8, 64>}, {transform_indices = @transform_1, window_bounds = array<i64: 8, 64>}]} {
    %c0 = arith.constant 0 : index
    %c0_0 = arith.constant 0 : index
    %c0_1 = arith.constant 0 : index
    %0 = vector.load %arg2[%c0, %c0_0, %c0_1] : memref<4x8x64xf32, #tpu.memory_space<vmem>>, vector<1x8x64xf32>
    %1 = vector.shape_cast %0 : vector<1x8x64xf32> to vector<8x64xf32>
    %c1 = arith.constant 1 : index
    %c0_2 = arith.constant 0 : index
    %c0_3 = arith.constant 0 : index
    %2 = vector.load %arg2[%c1, %c0_2, %c0_3] : memref<4x8x64xf32, #tpu.memory_space<vmem>>, vector<1x8x64xf32>
    %3 = vector.shape_cast %2 : vector<1x8x64xf32> to vector<8x64xf32>
    %c2 = arith.constant 2 : index
    %c0_4 = arith.constant 0 : index
    %c0_5 = arith.constant 0 : index
    %4 = vector.load %arg2[%c2, %c0_4, %c0_5] : memref<4x8x64xf32, #tpu.memory_space<vmem>>, vector<1x8x64xf32>
    %5 = vector.shape_cast %4 : vector<1x8x64xf32> to vector<8x64xf32>
    %c3 = arith.constant 3 : index
    %c0_6 = arith.constant 0 : index
    %c0_7 = arith.constant 0 : index
    %6 = vector.load %arg2[%c3, %c0_6, %c0_7] : memref<4x8x64xf32, #tpu.memory_space<vmem>>, vector<1x8x64xf32>
    %7 = vector.shape_cast %6 : vector<1x8x64xf32> to vector<8x64xf32>
    %8 = arith.addf %1, %3 : vector<8x64xf32>
    %9 = arith.addf %5, %7 : vector<8x64xf32>
    %10 = arith.addf %8, %9 : vector<8x64xf32>
    %cst = arith.constant 2.500000e-01 : f32
    %11 = vector.broadcast %cst : f32 to vector<8x64xf32>
    %12 = arith.mulf %10, %11 : vector<8x64xf32>
    %c0_8 = arith.constant 0 : index
    %c0_9 = arith.constant 0 : index
    %13 = vector.load %arg3[%c0_8, %c0_9] : memref<8x64xf32, #tpu.memory_space<vmem>>, vector<8x64xf32>
    tpu.vector_store %arg3[%c0_8, %c0_9], %12 {strides = array<i32>} : memref<8x64xf32, #tpu.memory_space<vmem>>, vector<8x64xf32>,
    return
  }
  func.func @transform_0(%arg0: i32, %arg1: i32) -> (i32, i32, i32) {
    %c0_i32 = arith.constant 0 : i32
    %c0_i32_0 = arith.constant 0 : i32
    return %c0_i32, %arg0, %arg1 : i32, i32, i32
  }
  func.func @transform_1(%arg0: i32, %arg1: i32) -> (i32, i32) {
    %c0_i32 = arith.constant 0 : i32
    return %arg0, %arg1 : i32, i32
  }
}

</mosaic_0001>

<llo_original>
// kernel: tpu_custom_call.1
$region0: #{tpu_custom_call.1}
  #allocation0 [shape = 'u32[]', space=smem, size = 0x4, offset = 0x4, fixed_abs, tag = 'smem constant byte address 0x4 - core index']
  #allocation1 [shape = 'u32[144,128]{1,0:T(1,128)}', space=vmem, size = 0x12000, scoped, tag = 'internal scratch']
  %s0 = inlined_call_operand.hbm [shape: f32[4,8,64], index: 0, kind: input, shape index: {}]
  %s1 = inlined_call_operand.hbm [shape: f32[8,64], index: 1, kind: output, shape index: {}]
  %s2 = sld [smem:[#allocation0]]
  $region18: #{tpu_custom_call.1} parent=0
    _
  %s4 = ssub.s32 1, %s2
  %s5 = scalar_select 0, %s4, %s2
  $region1: #{tpu_custom_call.1} parent=0
    #allocation2 [shape = 'u8[16384]{0}', space=vmem, size = 0x4000, scoped, tag = 'input window, operand 0, single buffered']
    #allocation3 [shape = 's32[1]{0}', space=sflag, size = 0x4, scoped, tag = 'scoped memory for tpu_custom_call.1']
    #allocation4 [shape = 's32[1]{0}', space=sflag, size = 0x4, scoped, tag = 'scoped memory for tpu_custom_call.1']
    #allocation5 [shape = 'u8[4096]{0}', space=vmem, size = 0x1000, scoped, tag = 'output window, operand 0, single buffered']
    %6 = vsyncpa [#allocation3], 0
    %7 = vsyncpa [#allocation4], 0
    // Predicated region
    $region2: #{tpu_custom_call.1} parent=1 // pred_check
      _
    $region3: #{tpu_custom_call.1} parent=1 // pred_check_branch
      %9 = sbr.rel (0) target = $region5
    $region4: #{tpu_custom_call.1} parent=1 // pred_region
      %s11 = ssub.s32 512, 512
      %12 = vsyncadd [#allocation3], %s11
      %s13 = sshll.u32 [#allocation2], 4
      %s14 = int_to_ptr.vmem [resolvable:$true] %s13
      %19 = dma.hbm_to_vmem [thread:$0]  %s0, 512, %s14, [#allocation3], 128, 128, 8
    $region5: #{tpu_custom_call.1} parent=1 // pred_fallthru
      _
    // Predicated region
    $region6: #{tpu_custom_call.1} parent=1 // pred_check
      _
    $region7: #{tpu_custom_call.1} parent=1 // pred_check_branch
      %21 = sbr.rel (0) target = $region9
    $region8: #{tpu_custom_call.1} parent=1 // pred_region
      %22 = dma.done [#allocation3], 512
    $region9: #{tpu_custom_call.1} parent=1 // pred_fallthru
      _
    %v23 = vld [vmem:[#allocation2] sm:$0xff]
    %s24 = scalar_lea.vmem [#allocation2], 8
    %v25 = vld [vmem:[%s24] sm:$0xff]
    %s26 = scalar_lea.vmem [#allocation2], 16
    %v27 = vld [vmem:[%s26] sm:$0xff]
    %s28 = scalar_lea.vmem [#allocation2], 24
    %v29 = vld [vmem:[%s28] sm:$0xff]
    %v30 = vadd.f32 %v23, %v25
    %v31 = vadd.f32 %v27, %v29
    %v32 = vadd.f32 %v30, %v31
    %v33 = vmul.f32 %v32, 0.25
    %vm34 = vcmask 523264
    %35 = vst.msk [vmem:[#allocation5] sm:$0xff] %vm34, %v33
    // Predicated region
    $region10: #{tpu_custom_call.1} parent=1 // pred_check
      _
    $region11: #{tpu_custom_call.1} parent=1 // pred_check_branch
      %37 = sbr.rel (0) target = $region13
    $region12: #{tpu_custom_call.1} parent=1 // pred_region
      %s39 = ssub.s32 128, 128
      %40 = vsyncadd [#allocation4], %s39
      %s42 = sshll.u32 [#allocation5], 4
      %s43 = int_to_ptr.vmem [resolvable:$true] %s42
      %45 = dma.vmem_to_hbm [thread:$0]  %s43, 128, %s1, [#allocation4]
    $region13: #{tpu_custom_call.1} parent=1 // pred_fallthru
      _
    // Predicated region
    $region14: #{tpu_custom_call.1} parent=1 // pred_check
      _
    $region15: #{tpu_custom_call.1} parent=1 // pred_check_branch
      %47 = sbr.rel (0) target = $region17
    $region16: #{tpu_custom_call.1} parent=1 // pred_region
      %48 = dma.done [#allocation4], 128
    $region17: #{tpu_custom_call.1} parent=1 // pred_fallthru
      _
    %49 = vsyncpa [#allocation3], 1
    %50 = vsyncpa [#allocation4], 1

</llo_original>
